<compile_context>
chip_gen: v7x
topology: tpu7x:2x2x1
jax: 0.10.0
libtpu: 0.0.40
codegen_flags: <defaults>
</compile_context>

<pallas_src>
import math

import jax
import jax.numpy as jnp
import numpy as np
from jax.experimental import pallas as pl
from jax.experimental.pallas import tpu as pltpu


def _round_up(n, m):
    return ((n + m - 1) // m) * m


def _softplus(x):
    # numerically stable softplus, matches torch.nn.Softplus default (beta=1)
    return jnp.maximum(x, 0.0) + jnp.log1p(jnp.exp(-jnp.abs(x)))


def _num_tensorcores():
    """Best-effort TensorCore count (1 on v5e/v6e, 2 on v7x); defaults to 1."""
    try:
        info = pltpu.get_tpu_info()
        for attr in ("num_tensorcores", "tensorcore_count", "num_cores", "core_count"):
            v = getattr(info, attr, None)
            if isinstance(v, int) and v > 0:
                return v
    except Exception:
        pass
    return 1


def scorenet_kernel(x_ref, w1_ref, b1_ref, w2_ref, b2_ref, w3_ref, b3_ref, o_ref):
    cdt = w1_ref.dtype  # MXU compute dtype (bf16 by default, f32 optional)
    # Cast the x tile in-kernel (VPU work hidden under the DMA); x stays in its
    # stored dtype in HBM so there is no extra wrapper-side cast pass.
    x = x_ref[...].astype(cdt)

    # h1 = softplus(x @ W1 + b1); MXU accumulates f32, bias/softplus in f32.
    h1 = jnp.dot(x, w1_ref[...], preferred_element_type=jnp.float32)
    h1 = _softplus(h1 + b1_ref[...]).astype(cdt)  # (1,H) bias broadcasts in the add

    # h2 = softplus(h1 @ W2 + b2)
    h2 = jnp.dot(h1, w2_ref[...], preferred_element_type=jnp.float32)
    h2 = _softplus(h2 + b2_ref[...]).astype(cdt)

    # out = h2 @ W3 + b3
    out = jnp.dot(h2, w3_ref[...], preferred_element_type=jnp.float32)
    o_ref[...] = (out + b3_ref[...]).astype(o_ref.dtype)


def _choose_tile_n(n, sublane, num_cores):
    """Batch tile (MXU M dim): multiple of the sublane packing (16 for bf16,
    8 for f32), capped at 1024 rows (VMEM is nowhere near binding at these
    D/H even on v7x's 64 MiB). Batches that would otherwise be a single tile
    are split only when there are >= 2 TensorCores to shard across."""
    cap = 1024
    n_r = _round_up(max(n, sublane), sublane)
    if n_r <= cap:
        if num_cores > 1 and n_r > 128:
            return min(cap, _round_up(-(-n_r // num_cores), sublane))
        return n_r
    return cap


def prepare_params(params, compute_dtype=jnp.bfloat16):
    """One-time parameter prep (outside the per-call path): weights cast to the
    MXU compute dtype, biases kept f32 (bias add / softplus run in f32)."""
    w1, b1, w2, b2, w3, b3 = params
    c = lambda w: w.astype(compute_dtype)
    f = lambda b: b.astype(jnp.float32)
    return (c(w1), f(b1), c(w2), f(b2), c(w3), f(b3))


def scorenet_forward(x, params, *, tile_n=None):
    """Fused MLP score network: (N, D) -> (N, D).

    `params` should come from `prepare_params` (weights already in the desired
    MXU compute dtype; bf16 recommended on all generations — the intermediate
    activations h1/h2 are also fed to the next matmul in that dtype, which is
    why the bf16 tolerance is looser). Output keeps x.dtype.
    """
    w1, b1, w2, b2, w3, b3 = params
    N, D = x.shape
    H = w1.shape[1]
    out_dtype = x.dtype
    compute_dtype = w1.dtype

    # NOTE: D, H multiples of 128 keep output stores lane-dense; if the real
    # image size gives e.g. D=784, pad the feature dim outside this call.
    sublane = 16 if jnp.dtype(compute_dtype).itemsize == 2 else 8
    if tile_n is None:
        tile_n = _choose_tile_n(N, sublane, _num_tensorcores())
    tile_n = _round_up(tile_n, sublane)

    grid = (pl.cdiv(N, tile_n),)  # partial trailing block handled by Pallas
    full = lambda i: (0, 0)       # weights / biases are grid-invariant blocks

    xb = jnp.dtype(x.dtype).itemsize
    cb = jnp.dtype(compute_dtype).itemsize
    ob = jnp.dtype(out_dtype).itemsize
    w_bytes = (D * H + H * H + H * D) * cb + (2 * H + D) * 4
    # double-buffered x/out tiles + (double-buffered) weights/biases + f32 and
    # compute-dtype intermediates; 1.5x headroom, 8 MiB floor, 64 MiB (v7x) cap.
    needed = (
        2 * tile_n * D * (xb + ob)
        + 2 * w_bytes
        + tile_n * (2 * H + D) * 4
        + tile_n * (2 * H + D) * cb
    )
    vmem_limit = int(min(max(needed * 3 // 2, 8 * 1024 * 1024), 64 * 1024 * 1024))

    cost = pl.CostEstimate(
        flops=2 * N * (D * H + H * H + H * D),
        transcendentals=4 * N * H,  # exp + log1p per hidden element, 2 layers
        bytes_accessed=N * D * (xb + ob) + w_bytes,
    )

    return pl.pallas_call(
        scorenet_kernel,
        out_shape=jax.ShapeDtypeStruct((N, D), out_dtype),
        grid_spec=pltpu.PrefetchScalarGridSpec(
            num_scalar_prefetch=0,
            grid=grid,
            in_specs=[
                pl.BlockSpec((tile_n, D), lambda i: (i, 0)),  # x tile
                pl.BlockSpec((D, H), full),                   # W1
                pl.BlockSpec((1, H), full),                   # b1
                pl.BlockSpec((H, H), full),                   # W2
                pl.BlockSpec((1, H), full),                   # b2
                pl.BlockSpec((H, D), full),                   # W3
                pl.BlockSpec((1, D), full),                   # b3
            ],
            out_specs=pl.BlockSpec((tile_n, D), lambda i: (i, 0)),
        ),
        compiler_params=pltpu.CompilerParams(
            dimension_semantics=("parallel",),
            vmem_limit_bytes=vmem_limit,
        ),
        cost_estimate=cost,
    )(x, w1, b1, w2, b2, w3, b3)


def init_params(key, d, h):
    """Deterministic init mimicking PyTorch nn.Linear default U(-1/sqrt(fan_in), +)."""
    ks = jax.random.split(key, 6)

    def lin(kw, kb, fan_in, fan_out):
        bound = 1.0 / math.sqrt(fan_in)
        w = jax.random.uniform(kw, (fan_in, fan_out), jnp.float32, -bound, bound)
        b = jax.random.uniform(kb, (1, fan_out), jnp.float32, -bound, bound)
        return w, b

    w1, b1 = lin(ks[0], ks[1], d, h)
    w2, b2 = lin(ks[2], ks[3], h, h)
    w3, b3 = lin(ks[4], ks[5], h, d)
    return (w1, b1, w2, b2, w3, b3)


def get_sigmas(sigma_begin, sigma_end, noise_level, sigma_type="geometric"):
    # buffer registered in ScoreNet.__init__ (not used by forward)
    if sigma_type == "geometric":
        return jnp.asarray(np.geomspace(sigma_begin, sigma_end, noise_level), jnp.float32)
    elif sigma_type == "linear":
        return jnp.asarray(np.linspace(sigma_begin, sigma_end, noise_level), jnp.float32)
    raise NotImplementedError(f"sigma distribution {sigma_type} not supported")


def reference_forward(x, params):
    w1, b1, w2, b2, w3, b3 = params
    h1 = jax.nn.softplus(x @ w1 + b1)
    h2 = jax.nn.softplus(h1 @ w2 + b2)
    return h2 @ w3 + b3


if __name__ == "__main__":
    # small shapes consistent with the module: images of (N, D), D = H*W
    N = 8          # batch
    IMG = 16       # 16x16 images -> D = 256 (multiple of 128 -> lane-dense stores)
    D = IMG * IMG
    HID = 128      # hidden width of the score MLP

    key = jax.random.PRNGKey(0)
    kx, kp, kx2 = jax.random.split(key, 3)
    x = jax.random.normal(kx, (N, D), jnp.float32)
    params_f32 = init_params(kp, D, HID)

    sigmas = get_sigmas(1.0, 0.01, 10, "geometric")  # registered buffer (unused in forward)

    ref = reference_forward(x, params_f32)

    # 1) f32 compute path (tight correctness check)
    p_f32 = prepare_params(params_f32, jnp.float32)
    out32 = jax.block_until_ready(scorenet_forward(x, p_f32))
    assert out32.shape == (N, D)
    assert jnp.allclose(out32, ref, atol=1e-4, rtol=1e-4), "f32 mismatch vs reference"

    # 2) default bf16 MXU path, tiny batch: 8 real rows in a 16-row tile
    #    (partial block -> padded reads / masked stores; no wrapper pad/slice)
    p_bf16 = prepare_params(params_f32, jnp.bfloat16)
    out_bf = jax.block_until_ready(scorenet_forward(x, p_bf16))
    assert out_bf.shape == (N, D)
    assert jnp.allclose(out_bf, ref, atol=7e-2, rtol=7e-2), "bf16 mismatch vs reference"

    # 3) larger ragged batch (300 rows): exercises the partial trailing block
    #    path at scale, still zero wrapper-side HBM passes
    N2 = 300
    x2 = jax.random.normal(kx2, (N2, D), jnp.float32)
    ref2 = reference_forward(x2, params_f32)
    out2 = jax.block_until_ready(scorenet_forward(x2, p_bf16))
    assert out2.shape == (N2, D)
    assert jnp.allclose(out2, ref2, atol=7e-2, rtol=7e-2), "tiled bf16 mismatch vs reference"

    print("KERNEL_OK")
</pallas_src>

<mosaic_0001>
module attributes {stable_mosaic.version = 11 : i64} {
  func.func @scorenet_kernel(%arg0: i32, %arg1: memref<8x256xf32, #tpu.memory_space<vmem>>, %arg2: memref<256x128xf32, #tpu.memory_space<vmem>>, %arg3: memref<1x128xf32, #tpu.memory_space<vmem>>, %arg4: memref<128x128xf32, #tpu.memory_space<vmem>>, %arg5: memref<1x128xf32, #tpu.memory_space<vmem>>, %arg6: memref<128x256xf32, #tpu.memory_space<vmem>>, %arg7: memref<1x256xf32, #tpu.memory_space<vmem>>, %arg8: memref<8x256xf32, #tpu.memory_space<vmem>>) attributes {dimension_semantics = [#tpu.dimension_semantics<parallel>], iteration_bounds = array<i64: 1>, scalar_prefetch = 0 : i64, scratch_operands = 0 : i64, tpu.core_type = #tpu.core_type<tc>, window_params = [{transform_indices = @transform_0, window_bounds = array<i64: 8, 256>}, {pipeline_mode = #tpu.pipeline_mode<synchronous>, transform_indices = @transform_1, window_bounds = array<i64: 256, 128>}, {pipeline_mode = #tpu.pipeline_mode<synchronous>, transform_indices = @transform_2, window_bounds = array<i64: 1, 128>}, {pipeline_mode = #tpu.pipeline_mode<synchronous>, transform_indices = @transform_3, window_bounds = array<i64: 128, 128>}, {pipeline_mode = #tpu.pipeline_mode<synchronous>, transform_indices = @transform_4, window_bounds = array<i64: 1, 128>}, {pipeline_mode = #tpu.pipeline_mode<synchronous>, transform_indices = @transform_5, window_bounds = array<i64: 128, 256>}, {pipeline_mode = #tpu.pipeline_mode<synchronous>, transform_indices = @transform_6, window_bounds = array<i64: 1, 256>}, {transform_indices = @transform_7, window_bounds = array<i64: 8, 256>}]} {
    %c0 = arith.constant 0 : index
    %c0_0 = arith.constant 0 : index
    %0 = vector.load %arg1[%c0, %c0_0] : memref<8x256xf32, #tpu.memory_space<vmem>>, vector<8x256xf32>
    %c0_1 = arith.constant 0 : index
    %c0_2 = arith.constant 0 : index
    %1 = vector.load %arg2[%c0_1, %c0_2] : memref<256x128xf32, #tpu.memory_space<vmem>>, vector<256x128xf32>
    %cst = arith.constant dense<0.000000e+00> : vector<8x128xf32>
    %2 = tpu.matmul %0, %1, %cst {dimension_numbers = #tpu.dot_dimension_numbers<[1], [0], [0], [1], [0, 0, 1, 1], [], []>} : vector<8x256xf32>, vector<256x128xf32>, vector<8x128xf32> -> vector<8x128xf32>
    %c0_3 = arith.constant 0 : index
    %c0_4 = arith.constant 0 : index
    %3 = vector.load %arg3[%c0_3, %c0_4] : memref<1x128xf32, #tpu.memory_space<vmem>>, vector<1x128xf32>
    %4 = vector.broadcast %3 : vector<1x128xf32> to vector<8x128xf32>
    %5 = arith.addf %2, %4 : vector<8x128xf32>
    %cst_5 = arith.constant 0.000000e+00 : f32
    %6 = vector.broadcast %cst_5 : f32 to vector<8x128xf32>
    %7 = arith.maximumf %5, %6 : vector<8x128xf32>
    %8 = math.absf %5 : vector<8x128xf32>
    %cst_6 = arith.constant 0.000000e+00 : f32
    %9 = vector.broadcast %cst_6 : f32 to vector<8x128xf32>
    %10 = arith.subf %9, %8 : vector<8x128xf32>
    %11 = math.exp %10 : vector<8x128xf32>
    %12 = math.log1p %11 : vector<8x128xf32>
    %13 = arith.addf %7, %12 : vector<8x128xf32>
    %c0_7 = arith.constant 0 : index
    %c0_8 = arith.constant 0 : index
    %14 = vector.load %arg4[%c0_7, %c0_8] : memref<128x128xf32, #tpu.memory_space<vmem>>, vector<128x128xf32>
    %cst_9 = arith.constant dense<0.000000e+00> : vector<8x128xf32>
    %15 = tpu.matmul %13, %14, %cst_9 {dimension_numbers = #tpu.dot_dimension_numbers<[1], [0], [0], [1], [0, 0, 1, 1], [], []>} : vector<8x128xf32>, vector<128x128xf32>, vector<8x128xf32> -> vector<8x128xf32>
    %c0_10 = arith.constant 0 : index
    %c0_11 = arith.constant 0 : index
    %16 = vector.load %arg5[%c0_10, %c0_11] : memref<1x128xf32, #tpu.memory_space<vmem>>, vector<1x128xf32>
    %17 = vector.broadcast %16 : vector<1x128xf32> to vector<8x128xf32>
    %18 = arith.addf %15, %17 : vector<8x128xf32>
    %cst_12 = arith.constant 0.000000e+00 : f32
    %19 = vector.broadcast %cst_12 : f32 to vector<8x128xf32>
    %20 = arith.maximumf %18, %19 : vector<8x128xf32>
    %21 = math.absf %18 : vector<8x128xf32>
    %cst_13 = arith.constant 0.000000e+00 : f32
    %22 = vector.broadcast %cst_13 : f32 to vector<8x128xf32>
    %23 = arith.subf %22, %21 : vector<8x128xf32>
    %24 = math.exp %23 : vector<8x128xf32>
    %25 = math.log1p %24 : vector<8x128xf32>
    %26 = arith.addf %20, %25 : vector<8x128xf32>
    %c0_14 = arith.constant 0 : index
    %c0_15 = arith.constant 0 : index
    %27 = vector.load %arg6[%c0_14, %c0_15] : memref<128x256xf32, #tpu.memory_space<vmem>>, vector<128x256xf32>
    %cst_16 = arith.constant dense<0.000000e+00> : vector<8x256xf32>
    %28 = tpu.matmul %26, %27, %cst_16 {dimension_numbers = #tpu.dot_dimension_numbers<[1], [0], [0], [1], [0, 0, 1, 1], [], []>} : vector<8x128xf32>, vector<128x256xf32>, vector<8x256xf32> -> vector<8x256xf32>
    %c0_17 = arith.constant 0 : index
    %c0_18 = arith.constant 0 : index
    %29 = vector.load %arg7[%c0_17, %c0_18] : memref<1x256xf32, #tpu.memory_space<vmem>>, vector<1x256xf32>
    %30 = vector.broadcast %29 : vector<1x256xf32> to vector<8x256xf32>
    %31 = arith.addf %28, %30 : vector<8x256xf32>
    %c0_19 = arith.constant 0 : index
    %c0_20 = arith.constant 0 : index
    %32 = vector.load %arg8[%c0_19, %c0_20] : memref<8x256xf32, #tpu.memory_space<vmem>>, vector<8x256xf32>
    tpu.vector_store %arg8[%c0_19, %c0_20], %31 {strides = array<i32>} : memref<8x256xf32, #tpu.memory_space<vmem>>, vector<8x256xf32>,
    return
  }
  func.func @transform_0(%arg0: i32) -> (i32, i32) {
    %c0_i32 = arith.constant 0 : i32
    %c0_i32_0 = arith.constant 0 : i32
    return %arg0, %c0_i32 : i32, i32
  }
  func.func @transform_1(%arg0: i32) -> (i32, i32) {
    %c0_i32 = arith.constant 0 : i32
    %c0_i32_0 = arith.constant 0 : i32
    %c0_i32_1 = arith.constant 0 : i32
    return %c0_i32, %c0_i32_0 : i32, i32
  }
  func.func @transform_2(%arg0: i32) -> (i32, i32) {
    %c0_i32 = arith.constant 0 : i32
    %c0_i32_0 = arith.constant 0 : i32
    %c0_i32_1 = arith.constant 0 : i32
    return %c0_i32, %c0_i32_0 : i32, i32
  }
  func.func @transform_3(%arg0: i32) -> (i32, i32) {
    %c0_i32 = arith.constant 0 : i32
    %c0_i32_0 = arith.constant 0 : i32
    %c0_i32_1 = arith.constant 0 : i32
    return %c0_i32, %c0_i32_0 : i32, i32
  }
  func.func @transform_4(%arg0: i32) -> (i32, i32) {
    %c0_i32 = arith.constant 0 : i32
    %c0_i32_0 = arith.constant 0 : i32
    %c0_i32_1 = arith.constant 0 : i32
    return %c0_i32, %c0_i32_0 : i32, i32
  }
  func.func @transform_5(%arg0: i32) -> (i32, i32) {
    %c0_i32 = arith.constant 0 : i32
    %c0_i32_0 = arith.constant 0 : i32
    %c0_i32_1 = arith.constant 0 : i32
    return %c0_i32, %c0_i32_0 : i32, i32
  }
  func.func @transform_6(%arg0: i32) -> (i32, i32) {
    %c0_i32 = arith.constant 0 : i32
    %c0_i32_0 = arith.constant 0 : i32
    %c0_i32_1 = arith.constant 0 : i32
    return %c0_i32, %c0_i32_0 : i32, i32
  }
  func.func @transform_7(%arg0: i32) -> (i32, i32) {
    %c0_i32 = arith.constant 0 : i32
    %c0_i32_0 = arith.constant 0 : i32
    return %arg0, %c0_i32 : i32, i32
  }
}

</mosaic_0001>

<llo_original>
// kernel: tpu_custom_call.1
$region0: #{tpu_custom_call.1}
  #allocation0 [shape = 'u32[]', space=smem, size = 0x4, offset = 0x4, fixed_abs, tag = 'smem constant byte address 0x4 - core index']
  #allocation1 [shape = 'u32[144,128]{1,0:T(1,128)}', space=vmem, size = 0x12000, scoped, tag = 'internal scratch']
  %s0 = inlined_call_operand.hbm [shape: f32[8,256], index: 0, kind: input, shape index: {}]
  %s1 = inlined_call_operand.hbm [shape: f32[256,128], index: 1, kind: input, shape index: {}]
  %s2 = inlined_call_operand.vmem [shape: f32[1,128], index: 2, kind: input, shape index: {}]
  %s3 = inlined_call_operand.hbm [shape: f32[128,128], index: 3, kind: input, shape index: {}]
  %s4 = inlined_call_operand.vmem [shape: f32[1,128], index: 4, kind: input, shape index: {}]
  %s5 = inlined_call_operand.hbm [shape: f32[128,256], index: 5, kind: input, shape index: {}]
  %s6 = inlined_call_operand.vmem [shape: f32[1,256], index: 6, kind: input, shape index: {}]
  %s7 = inlined_call_operand.hbm [shape: f32[8,256], index: 7, kind: output, shape index: {}]
  %s8 = sld [smem:[#allocation0]]
  $region54: #{tpu_custom_call.1} parent=0
    _
  %s10 = ssub.s32 1, %s8
  %s11 = scalar_select 0, %s10, %s8
  $region1: #{tpu_custom_call.1} parent=0
    #allocation2 [shape = 'u8[8192]{0}', space=vmem, size = 0x2000, scoped, tag = 'input window, operand 0, single buffered']
    #allocation3 [shape = 's32[1]{0}', space=sflag, size = 0x4, scoped, tag = 'scoped memory for tpu_custom_call.1']
    #allocation4 [shape = 's32[1]{0}', space=sflag, size = 0x4, scoped, tag = 'scoped memory for tpu_custom_call.1']
    #allocation5 [shape = 'u8[131072]{0}', space=vmem, size = 0x20000, scoped, tag = 'input window, operand 1, single buffered']
    #allocation6 [shape = 's32[1]{0}', space=sflag, size = 0x4, scoped, tag = 'scoped memory for tpu_custom_call.1']
    #allocation7 [shape = 'u8[65536]{0}', space=vmem, size = 0x10000, scoped, tag = 'input window, operand 3, single buffered']
    #allocation8 [shape = 'u8[131072]{0}', space=vmem, size = 0x20000, scoped, tag = 'input window, operand 5, single buffered']
    #allocation9 [shape = 's32[1]{0}', space=sflag, size = 0x4, scoped, tag = 'scoped memory for tpu_custom_call.1']
    #allocation10 [shape = 'u8[8192]{0}', space=vmem, size = 0x2000, scoped, tag = 'output window, operand 0, single buffered']
    %12 = vsyncpa [#allocation3], 0
    %13 = vsyncpa [#allocation6], 0
    %14 = vsyncpa [#allocation9], 0
    %15 = vsyncpa [#allocation4], 0
    // Predicated region
    $region2: #{tpu_custom_call.1} parent=1 // pred_check
      _
    $region3: #{tpu_custom_call.1} parent=1 // pred_check_branch
      %17 = sbr.rel (0) target = $region5
    $region4: #{tpu_custom_call.1} parent=1 // pred_region
      %s19 = ssub.s32 256, 256
      %20 = vsyncadd [#allocation3], %s19
      %s22 = sshll.u32 [#allocation2], 4
      %s23 = int_to_ptr.vmem [resolvable:$true] %s22
      %25 = dma.hbm_to_vmem [thread:$0]  %s0, 256, %s23, [#allocation3]
    $region5: #{tpu_custom_call.1} parent=1 // pred_fallthru
      _
    // Predicated region
    $region6: #{tpu_custom_call.1} parent=1 // pred_check
      _
    $region7: #{tpu_custom_call.1} parent=1 // pred_check_branch
      %27 = sbr.rel (0) target = $region9
    $region8: #{tpu_custom_call.1} parent=1 // pred_region
      %s29 = ssub.s32 4096, 4096
      %30 = vsyncadd [#allocation6], %s29
      %s31 = sshll.u32 [#allocation5], 4
      %s32 = int_to_ptr.vmem [resolvable:$true] %s31
      %37 = dma.hbm_to_vmem [thread:$0]  %s1, 4096, %s32, [#allocation6], 128, 128, 8
    $region9: #{tpu_custom_call.1} parent=1 // pred_fallthru
      _
    // Predicated region
    $region10: #{tpu_custom_call.1} parent=1 // pred_check
      _
    $region11: #{tpu_custom_call.1} parent=1 // pred_check_branch
      %39 = sbr.rel (0) target = $region13
    $region12: #{tpu_custom_call.1} parent=1 // pred_region
      _
    $region13: #{tpu_custom_call.1} parent=1 // pred_fallthru
      _
    // Predicated region
    $region14: #{tpu_custom_call.1} parent=1 // pred_check
      _
    $region15: #{tpu_custom_call.1} parent=1 // pred_check_branch
      %41 = sbr.rel (0) target = $region17
    $region16: #{tpu_custom_call.1} parent=1 // pred_region
      %s43 = ssub.s32 2048, 2048
      %44 = vsyncadd [#allocation6], %s43
      %s45 = sshll.u32 [#allocation7], 4
      %s46 = int_to_ptr.vmem [resolvable:$true] %s45
      %51 = dma.hbm_to_vmem [thread:$0]  %s3, 2048, %s46, [#allocation6], 128, 128, 8
    $region17: #{tpu_custom_call.1} parent=1 // pred_fallthru
      _
    // Predicated region
    $region18: #{tpu_custom_call.1} parent=1 // pred_check
      _
    $region19: #{tpu_custom_call.1} parent=1 // pred_check_branch
      %53 = sbr.rel (0) target = $region21
    $region20: #{tpu_custom_call.1} parent=1 // pred_region
      _
    $region21: #{tpu_custom_call.1} parent=1 // pred_fallthru
      _
    // Predicated region
    $region22: #{tpu_custom_call.1} parent=1 // pred_check
      _
    $region23: #{tpu_custom_call.1} parent=1 // pred_check_branch
      %55 = sbr.rel (0) target = $region25
    $region24: #{tpu_custom_call.1} parent=1 // pred_region
      %s57 = ssub.s32 4096, 4096
      %58 = vsyncadd [#allocation9], %s57
      %s59 = sshll.u32 [#allocation8], 4
      %s60 = int_to_ptr.vmem [resolvable:$true] %s59
      %65 = dma.hbm_to_vmem [thread:$0]  %s5, 4096, %s60, [#allocation9], 256, 256, 16
    $region25: #{tpu_custom_call.1} parent=1 // pred_fallthru
      _
    // Predicated region
    $region26: #{tpu_custom_call.1} parent=1 // pred_check
      _
    $region27: #{tpu_custom_call.1} parent=1 // pred_check_branch
      %67 = sbr.rel (0) target = $region29
    $region28: #{tpu_custom_call.1} parent=1 // pred_region
      _
    $region29: #{tpu_custom_call.1} parent=1 // pred_fallthru
      _
    // Predicated region
    $region30: #{tpu_custom_call.1} parent=1 // pred_check
      _
    $region31: #{tpu_custom_call.1} parent=1 // pred_check_branch
      %69 = sbr.rel (0) target = $region33
    $region32: #{tpu_custom_call.1} parent=1 // pred_region
      %70 = dma.done [#allocation3], 256
    $region33: #{tpu_custom_call.1} parent=1 // pred_fallthru
      _
    // Predicated region
    $region34: #{tpu_custom_call.1} parent=1 // pred_check
      _
    $region35: #{tpu_custom_call.1} parent=1 // pred_check_branch
      %72 = sbr.rel (0) target = $region37
    $region36: #{tpu_custom_call.1} parent=1 // pred_region
      %73 = dma.done [#allocation6], 4096
    $region37: #{tpu_custom_call.1} parent=1 // pred_fallthru
      _
    // Predicated region
    $region38: #{tpu_custom_call.1} parent=1 // pred_check
      _
    $region39: #{tpu_custom_call.1} parent=1 // pred_check_branch
      %75 = sbr.rel (0) target = $region41
    $region40: #{tpu_custom_call.1} parent=1 // pred_region
      %76 = dma.done [#allocation6], 2048
    $region41: #{tpu_custom_call.1} parent=1 // pred_fallthru
      _
    // Predicated region
    $region42: #{tpu_custom_call.1} parent=1 // pred_check
      _
    $region43: #{tpu_custom_call.1} parent=1 // pred_check_branch
      %78 = sbr.rel (0) target = $region45
    $region44: #{tpu_custom_call.1} parent=1 // pred_region
      %79 = dma.done [#allocation9], 4096
    $region45: #{tpu_custom_call.1} parent=1 // pred_fallthru
      _
    %v80 = vld [vmem:[#allocation2] sm:$0xff]
    %v81 = vld [vmem:[#allocation2 + $0x8] sm:$0xff]
    %v82 = vld [vmem:[#allocation5] sm:$0xff]
    %v83 = vld [vmem:[#allocation5 + $0x8] sm:$0xff]
    %v84 = vld [vmem:[#allocation5 + $0x10] sm:$0xff]
    %v85 = vld [vmem:[#allocation5 + $0x18] sm:$0xff]
    %v86 = vld [vmem:[#allocation5 + $0x20] sm:$0xff]
    %v87 = vld [vmem:[#allocation5 + $0x28] sm:$0xff]
    %v88 = vld [vmem:[#allocation5 + $0x30] sm:$0xff]
    %v89 = vld [vmem:[#allocation5 + $0x38] sm:$0xff]
    %v90 = vld [vmem:[#allocation5 + $0x40] sm:$0xff]
    %v91 = vld [vmem:[#allocation5 + $0x48] sm:$0xff]
    %v92 = vld [vmem:[#allocation5 + $0x50] sm:$0xff]
    %v93 = vld [vmem:[#allocation5 + $0x58] sm:$0xff]
    %v94 = vld [vmem:[#allocation5 + $0x60] sm:$0xff]
    %v95 = vld [vmem:[#allocation5 + $0x68] sm:$0xff]
    %v96 = vld [vmem:[#allocation5 + $0x70] sm:$0xff]
    %v97 = vld [vmem:[#allocation5 + $0x78] sm:$0xff]
    %v98 = vld [vmem:[#allocation5 + $0x80] sm:$0xff]
    %v99 = vld [vmem:[#allocation5 + $0x88] sm:$0xff]
    %v100 = vld [vmem:[#allocation5 + $0x90] sm:$0xff]
    %v101 = vld [vmem:[#allocation5 + $0x98] sm:$0xff]
    %v102 = vld [vmem:[#allocation5 + $0xa0] sm:$0xff]
    %v103 = vld [vmem:[#allocation5 + $0xa8] sm:$0xff]
    %v104 = vld [vmem:[#allocation5 + $0xb0] sm:$0xff]
    %v105 = vld [vmem:[#allocation5 + $0xb8] sm:$0xff]
    %v106 = vld [vmem:[#allocation5 + $0xc0] sm:$0xff]
    %v107 = vld [vmem:[#allocation5 + $0xc8] sm:$0xff]
    %v108 = vld [vmem:[#allocation5 + $0xd0] sm:$0xff]
    %v109 = vld [vmem:[#allocation5 + $0xd8] sm:$0xff]
    %v110 = vld [vmem:[#allocation5 + $0xe0] sm:$0xff]
    %v111 = vld [vmem:[#allocation5 + $0xe8] sm:$0xff]
    %v112 = vld [vmem:[#allocation5 + $0xf0] sm:$0xff]
    %v113 = vld [vmem:[#allocation5 + $0xf8] sm:$0xff]
    %v114 = vld [vmem:[%s2] sm:$0x1]
    %v116 = vlaneseq
    %v117 = vshrl.u32 %v116, 7
    %v118 = vsub.s32 0, %v117
    %v119 = vrot.slane %v114, %v118
    %121 = vmatprep.subr.mxu0 0.0
    %122 = vmatpush1.msra.mxu0 %v82
    %123 = vmatprep.subr.mxu0 0.0
    %124 = vmatpush1.msra.mxu0 %v83
    %125 = vmatprep.subr.mxu0 0.0
    %126 = vmatpush1.msra.mxu0 %v84
    %127 = vmatprep.subr.mxu0 0.0
    %128 = vmatpush1.msra.mxu0 %v85
    %129 = vmatprep.subr.mxu0 0.0
    %130 = vmatpush1.msra.mxu0 %v86
    %131 = vmatprep.subr.mxu0 0.0
    %132 = vmatpush1.msra.mxu0 %v87
    %133 = vmatprep.subr.mxu0 0.0
    %134 = vmatpush1.msra.mxu0 %v88
    %135 = vmatprep.subr.mxu0 0.0
    %136 = vmatpush1.msra.mxu0 %v89
    %137 = vmatprep.subr.mxu0 0.0
    %138 = vmatpush1.msra.mxu0 %v90
    %139 = vmatprep.subr.mxu0 0.0
    %140 = vmatpush1.msra.mxu0 %v91
    %141 = vmatprep.subr.mxu0 0.0
    %142 = vmatpush1.msra.mxu0 %v92
    %143 = vmatprep.subr.mxu0 0.0
    %144 = vmatpush1.msra.mxu0 %v93
    %145 = vmatprep.subr.mxu0 0.0
    %146 = vmatpush1.msra.mxu0 %v94
    %147 = vmatprep.subr.mxu0 0.0
    %148 = vmatpush1.msra.mxu0 %v95
    %149 = vmatprep.subr.mxu0 0.0
    %150 = vmatpush1.msra.mxu0 %v96
    %151 = vmatprep.subr.mxu0 0.0
    %152 = vmatpush1.msra.mxu0 %v97
    %153 = vmatprep.subr.mxu0 0.0
    %154 = vmatpush1.msra.mxu0 %v98
    %155 = vmatprep.subr.mxu0 0.0
    %156 = vmatpush1.msra.mxu0 %v99
    %157 = vmatprep.subr.mxu0 0.0
    %158 = vmatpush1.msra.mxu0 %v100
    %159 = vmatprep.subr.mxu0 0.0
    %160 = vmatpush1.msra.mxu0 %v101
    %161 = vmatprep.subr.mxu0 0.0
    %162 = vmatpush1.msra.mxu0 %v102
    %163 = vmatprep.subr.mxu0 0.0
    %164 = vmatpush1.msra.mxu0 %v103
    %165 = vmatprep.subr.mxu0 0.0
    %166 = vmatpush1.msra.mxu0 %v104
    %167 = vmatprep.subr.mxu0 0.0
    %168 = vmatpush1.msra.mxu0 %v105
    %169 = vmatprep.subr.mxu0 0.0
    %170 = vmatpush1.msra.mxu0 %v106
    %171 = vmatprep.subr.mxu0 0.0
    %172 = vmatpush1.msra.mxu0 %v107
    %173 = vmatprep.subr.mxu0 0.0
    %174 = vmatpush1.msra.mxu0 %v108
    %175 = vmatprep.subr.mxu0 0.0
    %176 = vmatpush1.msra.mxu0 %v109
    %177 = vmatprep.subr.mxu0 0.0
    %178 = vmatpush1.msra.mxu0 %v110
    %179 = vmatprep.subr.mxu0 0.0
    %180 = vmatpush1.msra.mxu0 %v111
    %181 = vmatprep.subr.mxu0 0.0
    %182 = vmatpush1.msra.mxu0 %v112
    %183 = vmatprep.subr.mxu0 0.0
    %184 = vmatpush1.msra.mxu0 %v113
    %185 = vmatprep.mubr.f32.mxu0 %v81
    %186 = vmatmul.mubr.f32.gmra.mrb[0].mxu0 %v80
    %v187 = vpop.f32.mrb[0].mxu0
    %v188 = vadd.f32 %v119, %v187
    %v189 = vpop.f32.mrb[0].mxu0
    %190 = vdwg.mxu0
    %v191 = vmax.f32 %v188, 0.0
    %v192 = vand.u32 2147483647, %v188
    %v193 = vsub.f32 0.0, %v192
    %v194 = vmul.f32 %v193, 1.442695
    %v195 = vpow.pop %v194
    %v196 = vadd.f32 %v195, 1.0
    %v197 = vlog2.pop %v196
    %v198 = vmul.f32 %v197, 0.6931472
    %v199 = vmul.f32 -0.5, %v195
    %v200 = vadd.f32 %v199, 1.0
    %v201 = vmul.f32 %v200, %v195
    %v202 = vand.u32 2147483647, %v195
    %vm203 = vcmp.lt.f32.partialorder %v202, 0.0004427343
    %v204 = vsel %vm203, %v201, %v198
    %v205 = vadd.f32 %v191, %v204
    %v206 = vld [vmem:[#allocation7] sm:$0xff]
    %v207 = vld [vmem:[#allocation7 + $0x8] sm:$0xff]
    %v208 = vld [vmem:[#allocation7 + $0x10] sm:$0xff]
    %v209 = vld [vmem:[#allocation7 + $0x18] sm:$0xff]
    %v210 = vld [vmem:[#allocation7 + $0x20] sm:$0xff]
    %v211 = vld [vmem:[#allocation7 + $0x28] sm:$0xff]
    %v212 = vld [vmem:[#allocation7 + $0x30] sm:$0xff]
    %v213 = vld [vmem:[#allocation7 + $0x38] sm:$0xff]
    %v214 = vld [vmem:[#allocation7 + $0x40] sm:$0xff]
    %v215 = vld [vmem:[#allocation7 + $0x48] sm:$0xff]
    %v216 = vld [vmem:[#allocation7 + $0x50] sm:$0xff]
    %v217 = vld [vmem:[#allocation7 + $0x58] sm:$0xff]
    %v218 = vld [vmem:[#allocation7 + $0x60] sm:$0xff]
    %v219 = vld [vmem:[#allocation7 + $0x68] sm:$0xff]
    %v220 = vld [vmem:[#allocation7 + $0x70] sm:$0xff]
    %v221 = vld [vmem:[#allocation7 + $0x78] sm:$0xff]
    %v222 = vld [vmem:[%s4] sm:$0x1]
    %v224 = vlaneseq
    %v225 = vshrl.u32 %v224, 7
    %v226 = vsub.s32 0, %v225
    %v227 = vrot.slane %v222, %v226
    %229 = vmatprep.subr.mxu0 0.0
    %230 = vmatpush1.msra.mxu0 %v206
    %231 = vmatprep.subr.mxu0 0.0
    %232 = vmatpush1.msra.mxu0 %v207
    %233 = vmatprep.subr.mxu0 0.0
    %234 = vmatpush1.msra.mxu0 %v208
    %235 = vmatprep.subr.mxu0 0.0
    %236 = vmatpush1.msra.mxu0 %v209
    %237 = vmatprep.subr.mxu0 0.0
    %238 = vmatpush1.msra.mxu0 %v210
    %239 = vmatprep.subr.mxu0 0.0
    %240 = vmatpush1.msra.mxu0 %v211
    %241 = vmatprep.subr.mxu0 0.0
    %242 = vmatpush1.msra.mxu0 %v212
    %243 = vmatprep.subr.mxu0 0.0
    %244 = vmatpush1.msra.mxu0 %v213
    %245 = vmatprep.subr.mxu0 0.0
    %246 = vmatpush1.msra.mxu0 %v214
    %247 = vmatprep.subr.mxu0 0.0
    %248 = vmatpush1.msra.mxu0 %v215
    %249 = vmatprep.subr.mxu0 0.0
    %250 = vmatpush1.msra.mxu0 %v216
    %251 = vmatprep.subr.mxu0 0.0
    %252 = vmatpush1.msra.mxu0 %v217
    %253 = vmatprep.subr.mxu0 0.0
    %254 = vmatpush1.msra.mxu0 %v218
    %255 = vmatprep.subr.mxu0 0.0
    %256 = vmatpush1.msra.mxu0 %v219
    %257 = vmatprep.subr.mxu0 0.0
    %258 = vmatpush1.msra.mxu0 %v220
    %259 = vmatprep.subr.mxu0 0.0
    %260 = vmatpush1.msra.mxu0 %v221
    %261 = vmatprep.subr.mxu0 0.0
    %262 = vmatpush1.msra.mxu0 0.0
    %263 = vmatprep.subr.mxu0 0.0
    %264 = vmatpush1.msra.mxu0 0.0
    %265 = vmatprep.subr.mxu0 0.0
    %266 = vmatpush1.msra.mxu0 0.0
    %267 = vmatprep.subr.mxu0 0.0
    %268 = vmatpush1.msra.mxu0 0.0
    %269 = vmatprep.subr.mxu0 0.0
    %270 = vmatpush1.msra.mxu0 0.0
    %271 = vmatprep.subr.mxu0 0.0
    %272 = vmatpush1.msra.mxu0 0.0
    %273 = vmatprep.subr.mxu0 0.0
    %274 = vmatpush1.msra.mxu0 0.0
    %275 = vmatprep.subr.mxu0 0.0
    %276 = vmatpush1.msra.mxu0 0.0
    %277 = vmatprep.subr.mxu0 0.0
    %278 = vmatpush1.msra.mxu0 0.0
    %279 = vmatprep.subr.mxu0 0.0
    %280 = vmatpush1.msra.mxu0 0.0
    %281 = vmatprep.subr.mxu0 0.0
    %282 = vmatpush1.msra.mxu0 0.0
    %283 = vmatprep.subr.mxu0 0.0
    %284 = vmatpush1.msra.mxu0 0.0
    %285 = vmatprep.subr.mxu0 0.0
    %286 = vmatpush1.msra.mxu0 0.0
    %287 = vmatprep.subr.mxu0 0.0
    %288 = vmatpush1.msra.mxu0 0.0
    %289 = vmatprep.subr.mxu0 0.0
    %290 = vmatpush1.msra.mxu0 0.0
    %291 = vmatprep.subr.mxu0 0.0
    %292 = vmatpush1.msra.mxu0 0.0
    %293 = vmatprep.mubr.f32.mxu0 0.0
    %294 = vmatmul.mubr.f32.gmra.mrb[0].mxu0 %v205
    %v295 = vpop.f32.mrb[0].mxu0
    %v296 = vadd.f32 %v227, %v295
    %v297 = vpop.f32.mrb[0].mxu0
    %298 = vdwg.mxu0
    %v299 = vmax.f32 %v296, 0.0
    %v300 = vand.u32 2147483647, %v296
    %v301 = vsub.f32 0.0, %v300
    %v302 = vmul.f32 %v301, 1.442695
    %v303 = vpow.pop %v302
    %v304 = vadd.f32 %v303, 1.0
    %v305 = vlog2.pop %v304
    %v306 = vmul.f32 %v305, 0.6931472
    %v307 = vmul.f32 -0.5, %v303
    %v308 = vadd.f32 %v307, 1.0
    %v309 = vmul.f32 %v308, %v303
    %v310 = vand.u32 2147483647, %v303
    %vm311 = vcmp.lt.f32.partialorder %v310, 0.0004427343
    %v312 = vsel %vm311, %v309, %v306
    %v313 = vadd.f32 %v299, %v312
    %v314 = vld [vmem:[#allocation8] sm:$0xff]
    %v315 = vld [vmem:[#allocation8 + $0x8] sm:$0xff]
    %v316 = vld [vmem:[#allocation8 + $0x10] sm:$0xff]
    %v317 = vld [vmem:[#allocation8 + $0x18] sm:$0xff]
    %v318 = vld [vmem:[#allocation8 + $0x20] sm:$0xff]
    %v319 = vld [vmem:[#allocation8 + $0x28] sm:$0xff]
    %v320 = vld [vmem:[#allocation8 + $0x30] sm:$0xff]
    %v321 = vld [vmem:[#allocation8 + $0x38] sm:$0xff]
    %v322 = vld [vmem:[#allocation8 + $0x40] sm:$0xff]
    %v323 = vld [vmem:[#allocation8 + $0x48] sm:$0xff]
    %v324 = vld [vmem:[#allocation8 + $0x50] sm:$0xff]
    %v325 = vld [vmem:[#allocation8 + $0x58] sm:$0xff]
    %v326 = vld [vmem:[#allocation8 + $0x60] sm:$0xff]
    %v327 = vld [vmem:[#allocation8 + $0x68] sm:$0xff]
    %v328 = vld [vmem:[#allocation8 + $0x70] sm:$0xff]
    %v329 = vld [vmem:[#allocation8 + $0x78] sm:$0xff]
    %v330 = vld [vmem:[#allocation8 + $0x80] sm:$0xff]
    %v331 = vld [vmem:[#allocation8 + $0x88] sm:$0xff]
    %v332 = vld [vmem:[#allocation8 + $0x90] sm:$0xff]
    %v333 = vld [vmem:[#allocation8 + $0x98] sm:$0xff]
    %v334 = vld [vmem:[#allocation8 + $0xa0] sm:$0xff]
    %v335 = vld [vmem:[#allocation8 + $0xa8] sm:$0xff]
    %v336 = vld [vmem:[#allocation8 + $0xb0] sm:$0xff]
    %v337 = vld [vmem:[#allocation8 + $0xb8] sm:$0xff]
    %v338 = vld [vmem:[#allocation8 + $0xc0] sm:$0xff]
    %v339 = vld [vmem:[#allocation8 + $0xc8] sm:$0xff]
    %v340 = vld [vmem:[#allocation8 + $0xd0] sm:$0xff]
    %v341 = vld [vmem:[#allocation8 + $0xd8] sm:$0xff]
    %v342 = vld [vmem:[#allocation8 + $0xe0] sm:$0xff]
    %v343 = vld [vmem:[#allocation8 + $0xe8] sm:$0xff]
    %v344 = vld [vmem:[#allocation8 + $0xf0] sm:$0xff]
    %v345 = vld [vmem:[#allocation8 + $0xf8] sm:$0xff]
    %v346 = vld [vmem:[%s6] sm:$0x3]
    %v348 = vlaneseq
    %v349 = vshrl.u32 %v348, 7
    %v350 = vsub.s32 0, %v349
    %v351 = vrot.slane %v346, %v350
    %v352 = vlaneseq
    %v353 = vshrl.u32 %v352, 7
    %v354 = vsub.s32 1, %v353
    %v355 = vrot.slane %v346, %v354
    %358 = vmatprep.subr.mxu0 %v315
    %359 = vmatpush1.msra.mxu0 %v314
    %360 = vmatprep.subr.mxu0 %v317
    %361 = vmatpush1.msra.mxu0 %v316
    %362 = vmatprep.subr.mxu0 %v319
    %363 = vmatpush1.msra.mxu0 %v318
    %364 = vmatprep.subr.mxu0 %v321
    %365 = vmatpush1.msra.mxu0 %v320
    %366 = vmatprep.subr.mxu0 %v323
    %367 = vmatpush1.msra.mxu0 %v322
    %368 = vmatprep.subr.mxu0 %v325
    %369 = vmatpush1.msra.mxu0 %v324
    %370 = vmatprep.subr.mxu0 %v327
    %371 = vmatpush1.msra.mxu0 %v326
    %372 = vmatprep.subr.mxu0 %v329
    %373 = vmatpush1.msra.mxu0 %v328
    %374 = vmatprep.subr.mxu0 %v331
    %375 = vmatpush1.msra.mxu0 %v330
    %376 = vmatprep.subr.mxu0 %v333
    %377 = vmatpush1.msra.mxu0 %v332
    %378 = vmatprep.subr.mxu0 %v335
    %379 = vmatpush1.msra.mxu0 %v334
    %380 = vmatprep.subr.mxu0 %v337
    %381 = vmatpush1.msra.mxu0 %v336
    %382 = vmatprep.subr.mxu0 %v339
    %383 = vmatpush1.msra.mxu0 %v338
    %384 = vmatprep.subr.mxu0 %v341
    %385 = vmatpush1.msra.mxu0 %v340
    %386 = vmatprep.subr.mxu0 %v343
    %387 = vmatpush1.msra.mxu0 %v342
    %388 = vmatprep.subr.mxu0 %v345
    %389 = vmatpush1.msra.mxu0 %v344
    %390 = vmatprep.subr.mxu0 0.0
    %391 = vmatpush1.msra.mxu0 0.0
    %392 = vmatprep.subr.mxu0 0.0
    %393 = vmatpush1.msra.mxu0 0.0
    %394 = vmatprep.subr.mxu0 0.0
    %395 = vmatpush1.msra.mxu0 0.0
    %396 = vmatprep.subr.mxu0 0.0
    %397 = vmatpush1.msra.mxu0 0.0
    %398 = vmatprep.subr.mxu0 0.0
    %399 = vmatpush1.msra.mxu0 0.0
    %400 = vmatprep.subr.mxu0 0.0
    %401 = vmatpush1.msra.mxu0 0.0
    %402 = vmatprep.subr.mxu0 0.0
    %403 = vmatpush1.msra.mxu0 0.0
    %404 = vmatprep.subr.mxu0 0.0
    %405 = vmatpush1.msra.mxu0 0.0
    %406 = vmatprep.subr.mxu0 0.0
    %407 = vmatpush1.msra.mxu0 0.0
    %408 = vmatprep.subr.mxu0 0.0
    %409 = vmatpush1.msra.mxu0 0.0
    %410 = vmatprep.subr.mxu0 0.0
    %411 = vmatpush1.msra.mxu0 0.0
    %412 = vmatprep.subr.mxu0 0.0
    %413 = vmatpush1.msra.mxu0 0.0
    %414 = vmatprep.subr.mxu0 0.0
    %415 = vmatpush1.msra.mxu0 0.0
    %416 = vmatprep.subr.mxu0 0.0
    %417 = vmatpush1.msra.mxu0 0.0
    %418 = vmatprep.subr.mxu0 0.0
    %419 = vmatpush1.msra.mxu0 0.0
    %420 = vmatprep.subr.mxu0 0.0
    %421 = vmatpush1.msra.mxu0 0.0
    %422 = vmatprep.mubr.f32.mxu0 0.0
    %423 = vmatmul.mubr.f32.gmra.mrb[0].mxu0 %v313
    %v424 = vpop.f32.mrb[0].mxu0
    %v425 = vadd.f32 %v351, %v424
    %v426 = vpop.f32.mrb[0].mxu0
    %v427 = vadd.f32 %v355, %v426
    %428 = vdwg.mxu0
    %429 = vst [vmem:[#allocation10] sm:$0xff] %v425
    %430 = vst [vmem:[#allocation10 + $0x8] sm:$0xff] %v427
    // Predicated region
    $region46: #{tpu_custom_call.1} parent=1 // pred_check
      _
    $region47: #{tpu_custom_call.1} parent=1 // pred_check_branch
      %432 = sbr.rel (0) target = $region49
    $region48: #{tpu_custom_call.1} parent=1 // pred_region
      %s434 = ssub.s32 256, 256
      %435 = vsyncadd [#allocation4], %s434
      %s437 = sshll.u32 [#allocation10], 4
      %s438 = int_to_ptr.vmem [resolvable:$true] %s437
      %440 = dma.vmem_to_hbm [thread:$0]  %s438, 256, %s7, [#allocation4]
    $region49: #{tpu_custom_call.1} parent=1 // pred_fallthru
      _
    // Predicated region
    $region50: #{tpu_custom_call.1} parent=1 // pred_check
      _
    $region51: #{tpu_custom_call.1} parent=1 // pred_check_branch
      %442 = sbr.rel (0) target = $region53
    $region52: #{tpu_custom_call.1} parent=1 // pred_region
      %443 = dma.done [#allocation4], 256
    $region53: #{tpu_custom_call.1} parent=1 // pred_fallthru
      _
    %444 = vsyncpa [#allocation3], 1
    %445 = vsyncpa [#allocation6], 1
    %446 = vsyncpa [#allocation9], 1
    %447 = vsyncpa [#allocation4], 1

</llo_original>
